<compile_context>
chip_gen: v6e
topology: v6e:2x2x1
jax: 0.10.0
libtpu: 0.0.40
codegen_flags: <defaults>
</compile_context>

<pallas_src>
import functools

import jax
import jax.numpy as jnp
from jax.experimental import pallas as pl
from jax.experimental.pallas import tpu as pltpu


# ---------------------------------------------------------------------------
# Kernel: one grid step handles a (TM, Din) tile of rows and produces a
# (TM, Dout) tile of probabilities.  Both Linears, the tanh and the sigmoid
# are fused so intermediate activations never touch HBM.
# ---------------------------------------------------------------------------

def _decoder_kernel(x_ref, w1_ref, b1_ref, w2_ref, b2_ref, out_ref):
    # fc1 + Tanh: bf16 MXU operands, f32 accumulation / elementwise.
    x = x_ref[...].astype(jnp.bfloat16)
    h = jnp.tanh(
        jnp.dot(x, w1_ref[...], preferred_element_type=jnp.float32)
        + b1_ref[...])
    # fc2 + Sigmoid, written directly to the output tile (true Dout lanes).
    z = (jnp.dot(h.astype(jnp.bfloat16), w2_ref[...],
                 preferred_element_type=jnp.float32)
         + b2_ref[...])
    out_ref[...] = 1.0 / (1.0 + jnp.exp(-z))


# ---------------------------------------------------------------------------
# Wrapper: true (unpadded) shapes everywhere; tile only the batch axis.
# ---------------------------------------------------------------------------

def _round_up(x, m):
    return ((x + m - 1) // m) * m


def decoder_forward(x, w1, b1, w2, b2):
    """x: (B, Din) f32; w1: (Din, H); b1: (H,); w2: (H, Dout); b2: (Dout,)."""
    B, Din = x.shape
    H = w1.shape[1]
    Dout = w2.shape[1]

    # Batch-row tile: >= 4 grid steps for moderate B (v7x megacore), capped at
    # 1024 rows for large B; always a multiple of 8 (sublane alignment).
    TM = min(_round_up(pl.cdiv(B, 4), 8), 1024)
    grid = (pl.cdiv(B, TM),)

    x = x.astype(jnp.float32)
    w1_b = w1.astype(jnp.bfloat16)                       # tiny, resident
    w2_b = w2.astype(jnp.bfloat16)                       # tiny, resident
    b1_2d = b1.astype(jnp.float32).reshape(1, H)
    b2_2d = b2.astype(jnp.float32).reshape(1, Dout)

    cost = pl.CostEstimate(
        flops=2 * B * Din * H + 2 * B * H * Dout,
        transcendentals=B * (H + Dout),
        bytes_accessed=(4 * B * Din                      # x read (f32)
                        + 2 * (Din * H + H * Dout)       # bf16 weights
                        + 4 * (H + Dout)                 # biases
                        + 4 * B * Dout),                 # output write
    )

    return pl.pallas_call(
        _decoder_kernel,
        out_shape=jax.ShapeDtypeStruct((B, Dout), jnp.float32),
        grid_spec=pltpu.PrefetchScalarGridSpec(
            num_scalar_prefetch=0,
            grid=grid,
            in_specs=[
                pl.BlockSpec((TM, Din), lambda i: (i, 0)),   # x tile (true width)
                pl.BlockSpec((Din, H), lambda i: (0, 0)),    # W1 (resident)
                pl.BlockSpec((1, H), lambda i: (0, 0)),      # b1
                pl.BlockSpec((H, Dout), lambda i: (0, 0)),   # W2 (resident)
                pl.BlockSpec((1, Dout), lambda i: (0, 0)),   # b2
            ],
            out_specs=pl.BlockSpec((TM, Dout), lambda i: (i, 0)),
        ),
        compiler_params=pltpu.CompilerParams(
            dimension_semantics=("parallel",),   # independent batch tiles
        ),
        cost_estimate=cost,
    )(x, w1_b, b1_2d, w2_b, b2_2d)


# ---------------------------------------------------------------------------
# Deterministic parameter construction (PyTorch nn.Linear default init).
# ---------------------------------------------------------------------------

def _init_linear(key, fan_in, fan_out):
    kw, kb = jax.random.split(key)
    bound = 1.0 / (fan_in ** 0.5)
    w = jax.random.uniform(kw, (fan_in, fan_out), jnp.float32, -bound, bound)
    b = jax.random.uniform(kb, (fan_out,), jnp.float32, -bound, bound)
    return w, b


def init_decoder(key, in_dim, logit_hidden, num_tools):
    k1, k2 = jax.random.split(key)
    w1, b1 = _init_linear(k1, in_dim, logit_hidden)
    w2, b2 = _init_linear(k2, logit_hidden, num_tools)
    return dict(w1=w1, b1=b1, w2=w2, b2=b2)


@jax.jit
def decoder_apply(params, x):
    return decoder_forward(x, params["w1"], params["b1"],
                           params["w2"], params["b2"])


def decoder_reference_f32(params, x):
    """Full-f32 reference (matches the PyTorch module's math)."""
    h = jnp.tanh(x @ params["w1"] + params["b1"])
    return jax.nn.sigmoid(h @ params["w2"] + params["b2"])


def decoder_reference_bf16(params, x):
    """Reference mimicking the kernel's bf16-operand / f32-accum dots."""
    w1 = params["w1"].astype(jnp.bfloat16)
    w2 = params["w2"].astype(jnp.bfloat16)
    h = jnp.tanh(jnp.dot(x.astype(jnp.bfloat16), w1,
                         preferred_element_type=jnp.float32) + params["b1"])
    z = jnp.dot(h.astype(jnp.bfloat16), w2,
                preferred_element_type=jnp.float32) + params["b2"]
    return 1.0 / (1.0 + jnp.exp(-z))


# ---------------------------------------------------------------------------
# Demo / smoke test.
# ---------------------------------------------------------------------------

if __name__ == "__main__":
    key = jax.random.PRNGKey(0)
    k_x, k_par = jax.random.split(key)

    # Small shapes consistent with the module's constants.
    GRAPH_HIDDEN = 64
    NUM_GOALS = 8
    LOGIT_HIDDEN = 128
    NUMTOOLS = 10
    BATCH = 2

    in_dim = GRAPH_HIDDEN + NUM_GOALS      # 72
    x = jax.random.normal(k_x, (BATCH, in_dim), jnp.float32)

    params = init_decoder(k_par, in_dim, LOGIT_HIDDEN, NUMTOOLS)

    out = decoder_apply(params, x)
    out = jax.block_until_ready(out)

    assert out.shape == (BATCH, NUMTOOLS) and out.dtype == jnp.float32

    # Tight check against a reference that uses the same bf16-operand dots.
    ref_b = decoder_reference_bf16(params, x)
    assert bool(jnp.allclose(out, ref_b, atol=5e-4, rtol=0)), \
        "mismatch vs bf16-dot reference"

    # Looser check against the full-f32 (PyTorch-equivalent) math.
    ref_f = decoder_reference_f32(params, x)
    assert bool(jnp.allclose(out, ref_f, atol=2e-2, rtol=0)), \
        "mismatch vs f32 reference"

    print("KERNEL_OK")
</pallas_src>

<mosaic_0001>
module attributes {stable_mosaic.version = 11 : i64} {
  func.func @_decoder_kernel(%arg0: i32, %arg1: memref<8x72xf32, #tpu.memory_space<vmem>>, %arg2: memref<72x128xbf16, #tpu.memory_space<vmem>>, %arg3: memref<1x128xf32, #tpu.memory_space<vmem>>, %arg4: memref<128x10xbf16, #tpu.memory_space<vmem>>, %arg5: memref<1x10xf32, #tpu.memory_space<vmem>>, %arg6: memref<8x10xf32, #tpu.memory_space<vmem>>) attributes {dimension_semantics = [#tpu.dimension_semantics<parallel>], iteration_bounds = array<i64: 1>, scalar_prefetch = 0 : i64, scratch_operands = 0 : i64, tpu.core_type = #tpu.core_type<tc>, window_params = [{transform_indices = @transform_0, window_bounds = array<i64: 8, 72>}, {pipeline_mode = #tpu.pipeline_mode<synchronous>, transform_indices = @transform_1, window_bounds = array<i64: 72, 128>}, {pipeline_mode = #tpu.pipeline_mode<synchronous>, transform_indices = @transform_2, window_bounds = array<i64: 1, 128>}, {pipeline_mode = #tpu.pipeline_mode<synchronous>, transform_indices = @transform_3, window_bounds = array<i64: 128, 10>}, {pipeline_mode = #tpu.pipeline_mode<synchronous>, transform_indices = @transform_4, window_bounds = array<i64: 1, 10>}, {transform_indices = @transform_5, window_bounds = array<i64: 8, 10>}]} {
    %c0 = arith.constant 0 : index
    %c0_0 = arith.constant 0 : index
    %0 = vector.load %arg1[%c0, %c0_0] : memref<8x72xf32, #tpu.memory_space<vmem>>, vector<8x72xf32>
    %1 = arith.truncf %0 : vector<8x72xf32> to vector<8x72xbf16>
    %c0_1 = arith.constant 0 : index
    %c0_2 = arith.constant 0 : index
    %2 = vector.load %arg2[%c0_1, %c0_2] : memref<72x128xbf16, #tpu.memory_space<vmem>>, vector<72x128xbf16>
    %cst = arith.constant dense<0.000000e+00> : vector<8x128xf32>
    %3 = tpu.matmul %1, %2, %cst {dimension_numbers = #tpu.dot_dimension_numbers<[1], [0], [0], [1], [0, 0, 1, 1], [], []>} : vector<8x72xbf16>, vector<72x128xbf16>, vector<8x128xf32> -> vector<8x128xf32>
    %c0_3 = arith.constant 0 : index
    %c0_4 = arith.constant 0 : index
    %4 = vector.load %arg3[%c0_3, %c0_4] : memref<1x128xf32, #tpu.memory_space<vmem>>, vector<1x128xf32>
    %5 = vector.broadcast %4 : vector<1x128xf32> to vector<8x128xf32>
    %6 = arith.addf %3, %5 : vector<8x128xf32>
    %7 = math.tanh %6 : vector<8x128xf32>
    %8 = arith.truncf %7 : vector<8x128xf32> to vector<8x128xbf16>
    %c0_5 = arith.constant 0 : index
    %c0_6 = arith.constant 0 : index
    %9 = vector.load %arg4[%c0_5, %c0_6] : memref<128x10xbf16, #tpu.memory_space<vmem>>, vector<128x10xbf16>
    %cst_7 = arith.constant dense<0.000000e+00> : vector<8x10xf32>
    %10 = tpu.matmul %8, %9, %cst_7 {dimension_numbers = #tpu.dot_dimension_numbers<[1], [0], [0], [1], [0, 0, 1, 1], [], []>} : vector<8x128xbf16>, vector<128x10xbf16>, vector<8x10xf32> -> vector<8x10xf32>
    %c0_8 = arith.constant 0 : index
    %c0_9 = arith.constant 0 : index
    %11 = vector.load %arg5[%c0_8, %c0_9] : memref<1x10xf32, #tpu.memory_space<vmem>>, vector<1x10xf32>
    %12 = vector.broadcast %11 : vector<1x10xf32> to vector<8x10xf32>
    %13 = arith.addf %10, %12 : vector<8x10xf32>
    %cst_10 = arith.constant 0.000000e+00 : f32
    %14 = vector.broadcast %cst_10 : f32 to vector<8x10xf32>
    %15 = arith.subf %14, %13 : vector<8x10xf32>
    %16 = math.exp %15 : vector<8x10xf32>
    %cst_11 = arith.constant 1.000000e+00 : f32
    %17 = vector.broadcast %cst_11 : f32 to vector<8x10xf32>
    %18 = arith.addf %17, %16 : vector<8x10xf32>
    %cst_12 = arith.constant 1.000000e+00 : f32
    %19 = vector.broadcast %cst_12 : f32 to vector<8x10xf32>
    %20 = arith.divf %19, %18 : vector<8x10xf32>
    %c0_13 = arith.constant 0 : index
    %c0_14 = arith.constant 0 : index
    %21 = vector.load %arg6[%c0_13, %c0_14] : memref<8x10xf32, #tpu.memory_space<vmem>>, vector<8x10xf32>
    tpu.vector_store %arg6[%c0_13, %c0_14], %20 {strides = array<i32>} : memref<8x10xf32, #tpu.memory_space<vmem>>, vector<8x10xf32>,
    return
  }
  func.func @transform_0(%arg0: i32) -> (i32, i32) {
    %c0_i32 = arith.constant 0 : i32
    %c0_i32_0 = arith.constant 0 : i32
    return %arg0, %c0_i32 : i32, i32
  }
  func.func @transform_1(%arg0: i32) -> (i32, i32) {
    %c0_i32 = arith.constant 0 : i32
    %c0_i32_0 = arith.constant 0 : i32
    %c0_i32_1 = arith.constant 0 : i32
    return %c0_i32, %c0_i32_0 : i32, i32
  }
  func.func @transform_2(%arg0: i32) -> (i32, i32) {
    %c0_i32 = arith.constant 0 : i32
    %c0_i32_0 = arith.constant 0 : i32
    %c0_i32_1 = arith.constant 0 : i32
    return %c0_i32, %c0_i32_0 : i32, i32
  }
  func.func @transform_3(%arg0: i32) -> (i32, i32) {
    %c0_i32 = arith.constant 0 : i32
    %c0_i32_0 = arith.constant 0 : i32
    %c0_i32_1 = arith.constant 0 : i32
    return %c0_i32, %c0_i32_0 : i32, i32
  }
  func.func @transform_4(%arg0: i32) -> (i32, i32) {
    %c0_i32 = arith.constant 0 : i32
    %c0_i32_0 = arith.constant 0 : i32
    %c0_i32_1 = arith.constant 0 : i32
    return %c0_i32, %c0_i32_0 : i32, i32
  }
  func.func @transform_5(%arg0: i32) -> (i32, i32) {
    %c0_i32 = arith.constant 0 : i32
    %c0_i32_0 = arith.constant 0 : i32
    return %arg0, %c0_i32 : i32, i32
  }
}

</mosaic_0001>

<llo_original>
// kernel: decoder_apply.1
$region0: #{decoder_apply.1}
  #allocation0 [shape = 'u32[]', space=smem, size = 0x4, offset = 0x4, fixed_abs, tag = 'smem constant byte address 0x4 - core index']
  #allocation1 [shape = 'u32[144,128]{1,0:T(1,128)}', space=vmem, size = 0x12000, scoped, tag = 'internal scratch']
  %s0 = inlined_call_operand.vmem [shape: f32[2,72], index: 0, kind: input, shape index: {}]
  %s1 = inlined_call_operand.vmem [shape: bf16[72,128], index: 1, kind: input, shape index: {}]
  %s2 = inlined_call_operand.vmem [shape: f32[1,128], index: 2, kind: input, shape index: {}]
  %s3 = inlined_call_operand.vmem [shape: bf16[128,10], index: 3, kind: input, shape index: {}]
  %s4 = inlined_call_operand.vmem [shape: f32[1,10], index: 4, kind: input, shape index: {}]
  %s5 = inlined_call_operand.hbm [shape: f32[2,10], index: 5, kind: output, shape index: {}]
  %s6 = sld [smem:[#allocation0]]
  $region30: #{decoder_apply.1} parent=0
    _
  %s8 = ssub.s32 1, %s6
  %s9 = scalar_select 0, %s8, %s6
  $region1: #{decoder_apply.1} parent=0
    #allocation2 [shape = 'u8[4096]{0}', space=vmem, size = 0x1000, scoped, tag = 'output window, operand 0, single buffered']
    #allocation3 [shape = 's32[1]{0}', space=sflag, size = 0x4, scoped, tag = 'scoped memory for decoder_apply.1']
    %10 = vsyncpa [#allocation3], 0
    // Predicated region
    $region2: #{decoder_apply.1} parent=1 // pred_check
      _
    $region3: #{decoder_apply.1} parent=1 // pred_check_branch
      %12 = sbr.rel (0) target = $region5
    $region4: #{decoder_apply.1} parent=1 // pred_region
      _
    $region5: #{decoder_apply.1} parent=1 // pred_fallthru
      _
    // Predicated region
    $region6: #{decoder_apply.1} parent=1 // pred_check
      _
    $region7: #{decoder_apply.1} parent=1 // pred_check_branch
      %14 = sbr.rel (0) target = $region9
    $region8: #{decoder_apply.1} parent=1 // pred_region
      _
    $region9: #{decoder_apply.1} parent=1 // pred_fallthru
      _
    // Predicated region
    $region10: #{decoder_apply.1} parent=1 // pred_check
      _
    $region11: #{decoder_apply.1} parent=1 // pred_check_branch
      %16 = sbr.rel (0) target = $region13
    $region12: #{decoder_apply.1} parent=1 // pred_region
      _
    $region13: #{decoder_apply.1} parent=1 // pred_fallthru
      _
    // Predicated region
    $region14: #{decoder_apply.1} parent=1 // pred_check
      _
    $region15: #{decoder_apply.1} parent=1 // pred_check_branch
      %18 = sbr.rel (0) target = $region17
    $region16: #{decoder_apply.1} parent=1 // pred_region
      _
    $region17: #{decoder_apply.1} parent=1 // pred_fallthru
      _
    // Predicated region
    $region18: #{decoder_apply.1} parent=1 // pred_check
      _
    $region19: #{decoder_apply.1} parent=1 // pred_check_branch
      %20 = sbr.rel (0) target = $region21
    $region20: #{decoder_apply.1} parent=1 // pred_region
      _
    $region21: #{decoder_apply.1} parent=1 // pred_fallthru
      _
    %v22 = vld [vmem:[%s0] sm:$0xff]
    %v23 = vpack.c.bf16 %v22, %v22
    %v24 = vld [vmem:[%s1] sm:$0xf]
    %v25 = vld [vmem:[%s1 + $0x4] sm:$0xf]
    %v26 = vld [vmem:[%s1 + $0x8] sm:$0xf]
    %v27 = vld [vmem:[%s1 + $0xc] sm:$0xf]
    %v28 = vld [vmem:[%s1 + $0x10] sm:$0xf]
    %v29 = vld [vmem:[%s1 + $0x14] sm:$0xf]
    %v30 = vld [vmem:[%s1 + $0x18] sm:$0xf]
    %v31 = vld [vmem:[%s1 + $0x1c] sm:$0xf]
    %v32 = vld [vmem:[%s1 + $0x20] sm:$0xf]
    %v33 = vld [vmem:[%s2] sm:$0x1]
    %v35 = vlaneseq
    %v36 = vshrl.u32 %v35, 7
    %v37 = vsub.s32 0, %v36
    %v38 = vrot.slane %v33, %v37
    %v49 = vunpack.c.l.b16 %v24
    %v50 = vunpack.c.l.b16 %v25
    %v51 = vunpack.c.l.b16 %v26
    %v52 = vunpack.c.l.b16 %v27
    %v53 = vunpack.c.l.b16 %v28
    %v54 = vunpack.c.l.b16 %v29
    %v55 = vunpack.c.l.b16 %v30
    %v56 = vunpack.c.l.b16 %v31
    %v57 = vunpack.c.l.b16 %v32
    %v58 = vpack.c.b16 %v50, %v49
    %v59 = vpack.c.b16 %v52, %v51
    %v60 = vpack.c.b16 %v54, %v53
    %v61 = vpack.c.b16 %v56, %v55
    %v62 = vpack.c.b16 %v57, %v57
    %vm67 = vcmask 588800
    %v69 = vsel %vm67, %v23, 0
    %vm71 = vcmask 1043456
    %v73 = vsel %vm71, %v62, 0
    %75 = vmatprep.subr.bf16.mxu0 0
    %76 = vmatpush1.bf16.msra.mxu0 0
    %77 = vmatprep.subr.bf16.mxu0 0
    %78 = vmatpush1.bf16.msra.mxu0 0
    %79 = vmatprep.subr.bf16.mxu0 0
    %80 = vmatpush1.bf16.msra.mxu0 0
    %81 = vmatprep.subr.bf16.mxu0 0
    %82 = vmatpush1.bf16.msra.mxu0 %v73
    %83 = vmatprep.subr.bf16.mxu0 0
    %84 = vmatpush1.bf16.msra.mxu0 %v61
    %85 = vmatprep.subr.bf16.mxu0 0
    %86 = vmatpush1.bf16.msra.mxu0 %v60
    %87 = vmatprep.subr.bf16.mxu0 0
    %88 = vmatpush1.bf16.msra.mxu0 %v59
    %89 = vmatprep.subr.bf16.mxu0 0
    %90 = vmatpush1.bf16.msra.mxu0 %v58
    %91 = vmatprep.subr.bf16.mxu0 0
    %92 = vmatpush2.bf16.msra.mxu0 0
    %93 = vmatprep.subr.bf16.mxu0 0
    %94 = vmatpush2.bf16.msra.mxu0 0
    %95 = vmatprep.subr.bf16.mxu0 0
    %96 = vmatpush2.bf16.msra.mxu0 0
    %97 = vmatprep.subr.bf16.mxu0 0
    %98 = vmatpush2.bf16.msra.mxu0 0
    %99 = vmatprep.subr.bf16.mxu0 0
    %100 = vmatpush2.bf16.msra.mxu0 0
    %101 = vmatprep.subr.bf16.mxu0 0
    %102 = vmatpush2.bf16.msra.mxu0 0
    %103 = vmatprep.subr.bf16.mxu0 0
    %104 = vmatpush2.bf16.msra.mxu0 0
    %105 = vmatprep.subr.bf16.mxu0 0
    %106 = vmatpush2.bf16.msra.mxu0 0
    %107 = vmatprep.mubr.bf16.mxu0 0
    %108 = vmatmul.mubr.bf16.gmra.mxu0 %v69
    %v109 = vpop.f32.mrf.mxu0
    %v110 = vadd.f32 %v38, %v109
    %v111 = vpop.f32.mrf.mxu0
    %v112 = vpop.f32.mrf.mxu0
    %v113 = vpop.f32.mrf.mxu0
    %114 = vdwg.mxu0
    %v115 = vtanh.pop %v110
    %v116 = vpack.c.bf16 %v115, %v115
    %v117 = vld [vmem:[%s3] sm:$0xf]
    %v118 = vld [vmem:[%s3 + $0x4] sm:$0xf]
    %v119 = vld [vmem:[%s3 + $0x8] sm:$0xf]
    %v120 = vld [vmem:[%s3 + $0xc] sm:$0xf]
    %v121 = vld [vmem:[%s3 + $0x10] sm:$0xf]
    %v122 = vld [vmem:[%s3 + $0x14] sm:$0xf]
    %v123 = vld [vmem:[%s3 + $0x18] sm:$0xf]
    %v124 = vld [vmem:[%s3 + $0x1c] sm:$0xf]
    %v125 = vld [vmem:[%s3 + $0x20] sm:$0xf]
    %v126 = vld [vmem:[%s3 + $0x24] sm:$0xf]
    %v127 = vld [vmem:[%s3 + $0x28] sm:$0xf]
    %v128 = vld [vmem:[%s3 + $0x2c] sm:$0xf]
    %v129 = vld [vmem:[%s3 + $0x30] sm:$0xf]
    %v130 = vld [vmem:[%s3 + $0x34] sm:$0xf]
    %v131 = vld [vmem:[%s3 + $0x38] sm:$0xf]
    %v132 = vld [vmem:[%s3 + $0x3c] sm:$0xf]
    %v133 = vld [vmem:[%s4] sm:$0x1]
    %v135 = vlaneseq
    %v136 = vshrl.u32 %v135, 7
    %v137 = vsub.s32 0, %v136
    %v138 = vrot.slane %v133, %v137
    %v156 = vunpack.c.l.b16 %v117
    %v157 = vunpack.c.l.b16 %v118
    %v158 = vunpack.c.l.b16 %v119
    %v159 = vunpack.c.l.b16 %v120
    %v160 = vunpack.c.l.b16 %v121
    %v161 = vunpack.c.l.b16 %v122
    %v162 = vunpack.c.l.b16 %v123
    %v163 = vunpack.c.l.b16 %v124
    %v164 = vunpack.c.l.b16 %v125
    %v165 = vunpack.c.l.b16 %v126
    %v166 = vunpack.c.l.b16 %v127
    %v167 = vunpack.c.l.b16 %v128
    %v168 = vunpack.c.l.b16 %v129
    %v169 = vunpack.c.l.b16 %v130
    %v170 = vunpack.c.l.b16 %v131
    %v171 = vunpack.c.l.b16 %v132
    %v172 = vpack.c.b16 %v157, %v156
    %v173 = vpack.c.b16 %v159, %v158
    %v174 = vpack.c.b16 %v161, %v160
    %v175 = vpack.c.b16 %v163, %v162
    %v176 = vpack.c.b16 %v165, %v164
    %v177 = vpack.c.b16 %v167, %v166
    %v178 = vpack.c.b16 %v169, %v168
    %v179 = vpack.c.b16 %v171, %v170
    %188 = vmatprep.subr.bf16.mxu0 0
    %189 = vmatpush1.bf16.msra.mxu0 %v179
    %190 = vmatprep.subr.bf16.mxu0 0
    %191 = vmatpush1.bf16.msra.mxu0 %v178
    %192 = vmatprep.subr.bf16.mxu0 0
    %193 = vmatpush1.bf16.msra.mxu0 %v177
    %194 = vmatprep.subr.bf16.mxu0 0
    %195 = vmatpush1.bf16.msra.mxu0 %v176
    %196 = vmatprep.subr.bf16.mxu0 0
    %197 = vmatpush1.bf16.msra.mxu0 %v175
    %198 = vmatprep.subr.bf16.mxu0 0
    %199 = vmatpush1.bf16.msra.mxu0 %v174
    %200 = vmatprep.subr.bf16.mxu0 0
    %201 = vmatpush1.bf16.msra.mxu0 %v173
    %202 = vmatprep.subr.bf16.mxu0 0
    %203 = vmatpush1.bf16.msra.mxu0 %v172
    %204 = vmatprep.subr.bf16.mxu0 0
    %205 = vmatpush2.bf16.msra.mxu0 0
    %206 = vmatprep.subr.bf16.mxu0 0
    %207 = vmatpush2.bf16.msra.mxu0 0
    %208 = vmatprep.subr.bf16.mxu0 0
    %209 = vmatpush2.bf16.msra.mxu0 0
    %210 = vmatprep.subr.bf16.mxu0 0
    %211 = vmatpush2.bf16.msra.mxu0 0
    %212 = vmatprep.subr.bf16.mxu0 0
    %213 = vmatpush2.bf16.msra.mxu0 0
    %214 = vmatprep.subr.bf16.mxu0 0
    %215 = vmatpush2.bf16.msra.mxu0 0
    %216 = vmatprep.subr.bf16.mxu0 0
    %217 = vmatpush2.bf16.msra.mxu0 0
    %218 = vmatprep.subr.bf16.mxu0 0
    %219 = vmatpush2.bf16.msra.mxu0 0
    %220 = vmatprep.mubr.bf16.mxu0 0
    %221 = vmatmul.mubr.bf16.gmra.mxu0 %v116
    %v222 = vpop.f32.mrf.mxu0
    %v223 = vadd.f32 %v138, %v222
    %v224 = vpop.f32.mrf.mxu0
    %v225 = vpop.f32.mrf.mxu0
    %v226 = vpop.f32.mrf.mxu0
    %227 = vdwg.mxu0
    %v228 = vsub.f32 0.0, %v223
    %v229 = vmul.f32 %v228, 1.442695
    %v230 = vpow.pop %v229
    %v231 = vadd.f32 %v230, 1.0
    %v232 = vrcp.pop %v231
    %v233 = vmul.f32 1.0, %v232
    %vm234 = vcmask 80896
    %235 = vst.msk [vmem:[#allocation2] sm:$0xff] %vm234, %v233
    // Predicated region
    $region22: #{decoder_apply.1} parent=1 // pred_check
      _
    $region23: #{decoder_apply.1} parent=1 // pred_check_branch
      %237 = sbr.rel (0) target = $region25
    $region24: #{decoder_apply.1} parent=1 // pred_region
      %s239 = ssub.s32 128, 32
      %240 = vsyncadd [#allocation3], %s239
      %s241 = sshll.u32 [#allocation2], 4
      %s242 = int_to_ptr.vmem [resolvable:$true] %s241
      %247 = dma.vmem_to_hbm [thread:$0]  %s242, 32, %s5, [#allocation3], 32, 32, 2
    $region25: #{decoder_apply.1} parent=1 // pred_fallthru
      _
    // Predicated region
    $region26: #{decoder_apply.1} parent=1 // pred_check
      _
    $region27: #{decoder_apply.1} parent=1 // pred_check_branch
      %249 = sbr.rel (0) target = $region29
    $region28: #{decoder_apply.1} parent=1 // pred_region
      %250 = dma.done [#allocation3], 128
    $region29: #{decoder_apply.1} parent=1 // pred_fallthru
      _
    %251 = vsyncpa [#allocation3], 1

</llo_original>
